<compile_context>
chip_gen: v7x
topology: tpu7x:2x2x1
jax: 0.10.0
libtpu: 0.0.40
codegen_flags: <defaults>
</compile_context>

<pallas_src>
import functools

import jax
import jax.numpy as jnp
from jax import lax
from jax.experimental import pallas as pl
from jax.experimental.pallas import tpu as pltpu


# Contract the last dim of both operands: y[m, n] = sum_k x[m, k] * w[n, k]
# (trans-b form; MXU-native, no in-kernel transpose / XLU relayout).
_DOT_LAST_LAST = (((1,), (1,)), ((), ()))


def _round_up(v, m):
    return (v + m - 1) // m * m


def _pad2d(a, rows, cols):
    pr, pc = rows - a.shape[0], cols - a.shape[1]
    if pr == 0 and pc == 0:
        return a
    return jnp.pad(a, ((0, pr), (0, pc)))


def _vmem_limit_bytes():
    """Generation-aware scoped-VMEM limit (leave headroom for compiler scratch)."""
    cap = 128 * 1024 * 1024
    try:
        info = pltpu.get_tpu_info()
        cap = int(getattr(info, "vmem_capacity_bytes", cap))
    except Exception:
        pass
    # ~48 MiB on v7x (64 MiB physical), capped at ~96-100 MiB on v5e/v6e.
    return min(cap * 3 // 4, 100 * 1024 * 1024)


# ---------------------------------------------------------------------------
# Small path: whole problem resident in VMEM, no grid.
# ---------------------------------------------------------------------------
def _nac_kernel_small(x_ref, w_ref, m_ref, o_ref, *, precision):
    w = jnp.tanh(w_ref[...]) * jax.nn.sigmoid(m_ref[...])      # (out, in)
    o_ref[...] = lax.dot_general(
        x_ref[...], w,
        dimension_numbers=_DOT_LAST_LAST,
        preferred_element_type=jnp.float32,
        precision=precision,
    ).astype(o_ref.dtype)


def _nac_small(x, w_, m_, precision):
    B = x.shape[0]
    N = w_.shape[0]
    vmem = pl.BlockSpec(memory_space=pltpu.MemorySpace.VMEM)
    return pl.pallas_call(
        functools.partial(_nac_kernel_small, precision=precision),
        out_shape=jax.ShapeDtypeStruct((B, N), jnp.float32),
        in_specs=[vmem, vmem, vmem],
        out_specs=vmem,
    )(x, w_, m_)


# ---------------------------------------------------------------------------
# Elementwise gate kernel (used when the weight tile would otherwise be
# re-gated for every batch tile).
# ---------------------------------------------------------------------------
def _gate_kernel(w_ref, m_ref, o_ref):
    o_ref[...] = jnp.tanh(w_ref[...]) * jax.nn.sigmoid(m_ref[...])


def _gate_weights(wp, mp, tn, tk):
    Np, Kp = wp.shape
    spec = pl.BlockSpec((tn, tk), lambda i, j: (i, j))
    return pl.pallas_call(
        _gate_kernel,
        out_shape=jax.ShapeDtypeStruct((Np, Kp), jnp.float32),
        grid=(Np // tn, Kp // tk),
        in_specs=[spec, pl.BlockSpec((tn, tk), lambda i, j: (i, j))],
        out_specs=pl.BlockSpec((tn, tk), lambda i, j: (i, j)),
        compiler_params=pltpu.CompilerParams(
            dimension_semantics=("parallel", "parallel"),
            vmem_limit_bytes=_vmem_limit_bytes(),
        ),
    )(wp, mp)


# ---------------------------------------------------------------------------
# Tiled matmul kernels: (N, M, K) grid, accumulate directly into o_ref (f32).
# ---------------------------------------------------------------------------
def _nac_kernel_tiled_fused(x_ref, w_ref, m_ref, o_ref, *, precision):
    @pl.when(pl.program_id(2) == 0)
    def _():
        o_ref[...] = jnp.zeros_like(o_ref)

    w = jnp.tanh(w_ref[...]) * jax.nn.sigmoid(m_ref[...])      # (tn, tk)
    o_ref[...] += lax.dot_general(
        x_ref[...], w,
        dimension_numbers=_DOT_LAST_LAST,
        preferred_element_type=jnp.float32,
        precision=precision,
    )


def _nac_kernel_tiled_pregated(x_ref, w_ref, o_ref, *, precision):
    @pl.when(pl.program_id(2) == 0)
    def _():
        o_ref[...] = jnp.zeros_like(o_ref)

    o_ref[...] += lax.dot_general(
        x_ref[...], w_ref[...],
        dimension_numbers=_DOT_LAST_LAST,
        preferred_element_type=jnp.float32,
        precision=precision,
    )


def _nac_tiled(x, w_, m_, tm, tn, tk, precision):
    B, K = x.shape
    N = w_.shape[0]

    # Respect the (8, 128) layout rule; don't over-tile (or over-pad) tiny dims.
    tm = min(tm, _round_up(B, 8))
    tn = min(tn, _round_up(N, 128))
    tk = min(tk, _round_up(K, 128))

    # v7x megacore: make sure the product of the parallel grid axes is >= 2
    # when possible so both TensorCores get work.
    if (_round_up(N, tn) // tn) * (_round_up(B, tm) // tm) == 1:
        if tn >= 256:
            tn //= 2
        elif tm >= 16:
            tm //= 2

    Bp, Kp, Np = _round_up(B, tm), _round_up(K, tk), _round_up(N, tn)
    # Grid (n, m, k): k innermost so the k-invariant output block acts as the
    # accumulator; weight index_maps ignore the batch axis.
    grid = (Np // tn, Bp // tm, Kp // tk)
    n_batch_tiles = grid[1]

    xp = _pad2d(x, Bp, Kp)

    x_spec = pl.BlockSpec((tm, tk), lambda j, i, k: (i, k))
    w_spec = pl.BlockSpec((tn, tk), lambda j, i, k: (j, k))
    m_spec = pl.BlockSpec((tn, tk), lambda j, i, k: (j, k))
    o_spec = pl.BlockSpec((tm, tn), lambda j, i, k: (i, j))

    compiler_params = pltpu.CompilerParams(
        dimension_semantics=("parallel", "parallel", "arbitrary"),
        vmem_limit_bytes=_vmem_limit_bytes(),
    )

    if n_batch_tiles > 1:
        # Gate once, feed the matmul a single weight stream (halves weight DMA
        # and removes per-batch-tile tanh/sigmoid recompute on the EUP).
        wp = _pad2d(w_, Np, Kp)
        mp = _pad2d(m_, Np, Kp)
        wg = _gate_weights(wp, mp, tn, tk)
        yp = pl.pallas_call(
            functools.partial(_nac_kernel_tiled_pregated, precision=precision),
            out_shape=jax.ShapeDtypeStruct((Bp, Np), jnp.float32),
            grid=grid,
            in_specs=[x_spec, w_spec],
            out_specs=o_spec,
            compiler_params=compiler_params,
        )(xp, wg)
    else:
        # Single batch tile: each weight tile is gated exactly once anyway,
        # keep the gate fused (avoids an extra HBM round-trip of W).
        wp = _pad2d(w_, Np, Kp)
        mp = _pad2d(m_, Np, Kp)
        yp = pl.pallas_call(
            functools.partial(_nac_kernel_tiled_fused, precision=precision),
            out_shape=jax.ShapeDtypeStruct((Bp, Np), jnp.float32),
            grid=grid,
            in_specs=[x_spec, w_spec, m_spec],
            out_specs=o_spec,
            compiler_params=compiler_params,
        )(xp, wp, mp)

    return yp[:B, :N]


# ---------------------------------------------------------------------------
# Public wrapper.
# ---------------------------------------------------------------------------
def nac_cell(x, w_, m_, *, tm=512, tn=512, tk=512, use_tiled=None,
             precision=lax.Precision.HIGHEST,
             small_vmem_budget_bytes=8 * 1024 * 1024):
    """NacCell forward: x (B, in), w_/m_ (out, in) -> (B, out), float32."""
    assert x.ndim == 2 and w_.shape == m_.shape
    assert x.shape[1] == w_.shape[1]

    if use_tiled is None:
        B, K = x.shape
        N = w_.shape[0]
        # x, W_, M_, gated W and y all f32-resident for the small path.
        footprint = 4 * (B * K + 3 * N * K + B * N)
        use_tiled = footprint > small_vmem_budget_bytes

    if use_tiled:
        return _nac_tiled(x, w_, m_, tm, tn, tk, precision)
    return _nac_small(x, w_, m_, precision)


def xavier_uniform(key, shape):
    # torch.nn.init.xavier_uniform_ with gain=1; shape = (out, in)
    fan_out, fan_in = shape
    bound = (6.0 / (fan_in + fan_out)) ** 0.5
    return jax.random.uniform(key, shape, jnp.float32, -bound, bound)


if __name__ == "__main__":
    key = jax.random.PRNGKey(0)
    keys = jax.random.split(key, 9)

    # --- Module-sized problem (small, grid-free path) ----------------------
    in_shape, out_shape, batch = 32, 16, 8
    x = jax.random.normal(keys[0], (batch, in_shape), jnp.float32)
    W_ = xavier_uniform(keys[1], (out_shape, in_shape))
    M_ = xavier_uniform(keys[2], (out_shape, in_shape))

    y = nac_cell(x, W_, M_)
    jax.block_until_ready(y)

    W = jnp.tanh(W_) * jax.nn.sigmoid(M_)
    y_ref = jnp.dot(x, W.T, precision=lax.Precision.HIGHEST)
    assert y.shape == (batch, out_shape)
    assert jnp.allclose(y, y_ref, atol=1e-5, rtol=1e-5)

    # --- Tiled path, single batch tile (fused gating), non-aligned dims ----
    B2, K2, N2 = 8, 320, 48
    x2 = jax.random.normal(keys[3], (B2, K2), jnp.float32)
    W2_ = xavier_uniform(keys[4], (N2, K2))
    M2_ = xavier_uniform(keys[5], (N2, K2))

    y2 = nac_cell(x2, W2_, M2_, tm=128, tn=128, tk=128, use_tiled=True)
    jax.block_until_ready(y2)

    W2 = jnp.tanh(W2_) * jax.nn.sigmoid(M2_)
    y2_ref = jnp.dot(x2, W2.T, precision=lax.Precision.HIGHEST)
    assert y2.shape == (B2, N2)
    assert jnp.allclose(y2, y2_ref, atol=1e-4, rtol=1e-4)

    # --- Tiled path, multiple batch tiles (pre-gated weights) --------------
    B3, K3, N3 = 40, 96, 24
    x3 = jax.random.normal(keys[6], (B3, K3), jnp.float32)
    W3_ = xavier_uniform(keys[7], (N3, K3))
    M3_ = xavier_uniform(keys[8], (N3, K3))

    y3 = nac_cell(x3, W3_, M3_, tm=16, tn=128, tk=128, use_tiled=True)
    jax.block_until_ready(y3)

    W3 = jnp.tanh(W3_) * jax.nn.sigmoid(M3_)
    y3_ref = jnp.dot(x3, W3.T, precision=lax.Precision.HIGHEST)
    assert y3.shape == (B3, N3)
    assert jnp.allclose(y3, y3_ref, atol=1e-4, rtol=1e-4)

    print("KERNEL_OK")
</pallas_src>

<mosaic_0001>
module attributes {stable_mosaic.version = 11 : i64} {
  func.func @_nac_kernel_small(%arg0: memref<8x32xf32, #tpu.memory_space<vmem>>, %arg1: memref<16x32xf32, #tpu.memory_space<vmem>>, %arg2: memref<16x32xf32, #tpu.memory_space<vmem>>, %arg3: memref<8x16xf32, #tpu.memory_space<vmem>>) attributes {dimension_semantics = [], scalar_prefetch = 0 : i64, scratch_operands = 0 : i64, tpu.core_type = #tpu.core_type<tc>} {
    %c0 = arith.constant 0 : index
    %c0_0 = arith.constant 0 : index
    %0 = vector.load %arg1[%c0, %c0_0] : memref<16x32xf32, #tpu.memory_space<vmem>>, vector<16x32xf32>
    %1 = math.tanh %0 : vector<16x32xf32>
    %c0_1 = arith.constant 0 : index
    %c0_2 = arith.constant 0 : index
    %2 = vector.load %arg2[%c0_1, %c0_2] : memref<16x32xf32, #tpu.memory_space<vmem>>, vector<16x32xf32>
    %3 = arith.negf %2 : vector<16x32xf32>
    %4 = math.exp %3 : vector<16x32xf32>
    %cst = arith.constant 1.000000e+00 : f32
    %5 = vector.broadcast %cst : f32 to vector<16x32xf32>
    %6 = arith.addf %5, %4 : vector<16x32xf32>
    %7 = arith.divf %5, %6 : vector<16x32xf32>
    %8 = arith.mulf %1, %7 : vector<16x32xf32>
    %c0_3 = arith.constant 0 : index
    %c0_4 = arith.constant 0 : index
    %9 = vector.load %arg0[%c0_3, %c0_4] : memref<8x32xf32, #tpu.memory_space<vmem>>, vector<8x32xf32>
    %cst_5 = arith.constant dense<0.000000e+00> : vector<8x16xf32>
    %10 = tpu.matmul %9, %8, %cst_5 {dimension_numbers = #tpu.dot_dimension_numbers<[1], [1], [0], [0], [0, 0, 1, 0], [], []>, precision = #tpu.contract_precision<fp32>} : vector<8x32xf32>, vector<16x32xf32>, vector<8x16xf32> -> vector<8x16xf32>
    %c0_6 = arith.constant 0 : index
    %c0_7 = arith.constant 0 : index
    %11 = vector.load %arg3[%c0_6, %c0_7] : memref<8x16xf32, #tpu.memory_space<vmem>>, vector<8x16xf32>
    tpu.vector_store %arg3[%c0_6, %c0_7], %10 {strides = array<i32>} : memref<8x16xf32, #tpu.memory_space<vmem>>, vector<8x16xf32>,
    return
  }
}

</mosaic_0001>

<llo_original>
// kernel: tpu_custom_call.1
$region0: #{tpu_custom_call.1}
  #allocation0 [shape = 'u32[]', space=smem, size = 0x4, offset = 0x4, fixed_abs, tag = 'smem constant byte address 0x4 - core index']
  #allocation1 [shape = 'u32[144,128]{1,0:T(1,128)}', space=vmem, size = 0x12000, scoped, tag = 'internal scratch']
  %s0 = inlined_call_operand.hbm [shape: f32[8,32], index: 0, kind: input, shape index: {}]
  %s1 = inlined_call_operand.hbm [shape: f32[16,32], index: 1, kind: input, shape index: {}]
  %s2 = inlined_call_operand.hbm [shape: f32[16,32], index: 2, kind: input, shape index: {}]
  %s3 = inlined_call_operand.hbm [shape: f32[8,16], index: 3, kind: output, shape index: {}]
  %s4 = sld [smem:[#allocation0]]
  $region34: #{tpu_custom_call.1} parent=0
    _
  %s6 = ssub.s32 1, %s4
  %s7 = scalar_select 0, %s6, %s4
  $region1: #{tpu_custom_call.1} parent=0
    #allocation2 [shape = 'u8[4096]{0}', space=vmem, size = 0x1000, scoped, tag = 'input window, operand 0, single buffered']
    #allocation3 [shape = 's32[1]{0}', space=sflag, size = 0x4, scoped, tag = 'scoped memory for tpu_custom_call.1']
    #allocation4 [shape = 's32[1]{0}', space=sflag, size = 0x4, scoped, tag = 'scoped memory for tpu_custom_call.1']
    #allocation5 [shape = 'u8[8192]{0}', space=vmem, size = 0x2000, scoped, tag = 'input window, operand 1, single buffered']
    #allocation6 [shape = 's32[1]{0}', space=sflag, size = 0x4, scoped, tag = 'scoped memory for tpu_custom_call.1']
    #allocation7 [shape = 'u8[8192]{0}', space=vmem, size = 0x2000, scoped, tag = 'input window, operand 2, single buffered']
    #allocation8 [shape = 'u8[4096]{0}', space=vmem, size = 0x1000, scoped, tag = 'output window, operand 0, single buffered']
    %8 = vsyncpa [#allocation3], 0
    %9 = vsyncpa [#allocation6], 0
    %10 = vsyncpa [#allocation4], 0
    // Predicated region
    $region2: #{tpu_custom_call.1} parent=1 // pred_check
      _
    $region3: #{tpu_custom_call.1} parent=1 // pred_check_branch
      %12 = sbr.rel (0) target = $region5
    $region4: #{tpu_custom_call.1} parent=1 // pred_region
      %s14 = ssub.s32 128, 128
      %15 = vsyncadd [#allocation3], %s14
      %s17 = sshll.u32 [#allocation2], 4
      %s18 = int_to_ptr.vmem [resolvable:$true] %s17
      %20 = dma.hbm_to_vmem [thread:$0]  %s0, 128, %s18, [#allocation3]
    $region5: #{tpu_custom_call.1} parent=1 // pred_fallthru
      _
    // Predicated region
    $region6: #{tpu_custom_call.1} parent=1 // pred_check
      _
    $region7: #{tpu_custom_call.1} parent=1 // pred_check_branch
      %22 = sbr.rel (0) target = $region9
    $region8: #{tpu_custom_call.1} parent=1 // pred_region
      %s24 = ssub.s32 256, 256
      %25 = vsyncadd [#allocation6], %s24
      %s26 = sshll.u32 [#allocation5], 4
      %s27 = int_to_ptr.vmem [resolvable:$true] %s26
      %32 = dma.hbm_to_vmem [thread:$0]  %s1, 256, %s27, [#allocation6], 128, 128, 8
    $region9: #{tpu_custom_call.1} parent=1 // pred_fallthru
      _
    // Predicated region
    $region10: #{tpu_custom_call.1} parent=1 // pred_check
      _
    $region11: #{tpu_custom_call.1} parent=1 // pred_check_branch
      %34 = sbr.rel (0) target = $region13
    $region12: #{tpu_custom_call.1} parent=1 // pred_region
      %s36 = ssub.s32 256, 256
      %37 = vsyncadd [#allocation6], %s36
      %s38 = sshll.u32 [#allocation7], 4
      %s39 = int_to_ptr.vmem [resolvable:$true] %s38
      %44 = dma.hbm_to_vmem [thread:$0]  %s2, 256, %s39, [#allocation6], 128, 128, 8
    $region13: #{tpu_custom_call.1} parent=1 // pred_fallthru
      _
    // Predicated region
    $region14: #{tpu_custom_call.1} parent=1 // pred_check
      _
    $region15: #{tpu_custom_call.1} parent=1 // pred_check_branch
      %46 = sbr.rel (0) target = $region17
    $region16: #{tpu_custom_call.1} parent=1 // pred_region
      %47 = dma.done [#allocation3], 128
    $region17: #{tpu_custom_call.1} parent=1 // pred_fallthru
      _
    // Predicated region
    $region18: #{tpu_custom_call.1} parent=1 // pred_check
      _
    $region19: #{tpu_custom_call.1} parent=1 // pred_check_branch
      %49 = sbr.rel (0) target = $region21
    $region20: #{tpu_custom_call.1} parent=1 // pred_region
      %50 = dma.done [#allocation6], 256
    $region21: #{tpu_custom_call.1} parent=1 // pred_fallthru
      _
    // Predicated region
    $region22: #{tpu_custom_call.1} parent=1 // pred_check
      _
    $region23: #{tpu_custom_call.1} parent=1 // pred_check_branch
      %52 = sbr.rel (0) target = $region25
    $region24: #{tpu_custom_call.1} parent=1 // pred_region
      %53 = dma.done [#allocation6], 256
    $region25: #{tpu_custom_call.1} parent=1 // pred_fallthru
      _
    %v54 = vld [vmem:[#allocation5] sm:$0xff]
    %v55 = vld [vmem:[#allocation5 + $0x8] sm:$0xff]
    %v56 = vtanh.pop %v54
    %v57 = vtanh.pop %v55
    %v58 = vld [vmem:[#allocation7] sm:$0xff]
    %v59 = vld [vmem:[#allocation7 + $0x8] sm:$0xff]
    %v60 = vxor.u32 %v58, 2147483648
    %v61 = vxor.u32 %v59, 2147483648
    %v62 = vmul.f32 %v60, 1.442695
    %v63 = vpow.pop %v62
    %v64 = vmul.f32 %v61, 1.442695
    %v65 = vpow.pop %v64
    %v66 = vadd.f32 %v63, 1.0
    %v67 = vadd.f32 %v65, 1.0
    %v68 = vrcp.pop %v66
    %v69 = vmul.f32 1.0, %v68
    %v70 = vrcp.pop %v67
    %v71 = vmul.f32 1.0, %v70
    %v72 = vmul.f32 %v56, %v69
    %v73 = vmul.f32 %v57, %v71
    %v74 = vld [vmem:[#allocation2] sm:$0xff]
    %vm75 = vcmask 261120
    %v77 = vsel %vm75, %v74, 0
    %v80 = vsel %vm75, %v72, 0
    %v83 = vsel %vm75, %v73, 0
    %85 = vmatprep.subr.mxu0 0.0
    %v86 = vand.u32 %v80, 4294901760
    %87 = vmatpush1.xpose.msra.mxu0 %v86
    %88 = vmatprep.subr.mxu0 0.0
    %v89 = vand.u32 %v83, 4294901760
    %90 = vmatpush1.xpose.msra.mxu0 %v89
    %91 = vmatprep.subr.mxu0 0.0
    %92 = vmatpush1.xpose.msra.mxu0 0.0
    %93 = vmatprep.subr.mxu0 0.0
    %94 = vmatpush1.xpose.msra.mxu0 0.0
    %95 = vmatprep.subr.mxu0 0.0
    %96 = vmatpush1.xpose.msra.mxu0 0.0
    %97 = vmatprep.subr.mxu0 0.0
    %98 = vmatpush1.xpose.msra.mxu0 0.0
    %99 = vmatprep.subr.mxu0 0.0
    %100 = vmatpush1.xpose.msra.mxu0 0.0
    %101 = vmatprep.subr.mxu0 0.0
    %102 = vmatpush1.xpose.msra.mxu0 0.0
    %103 = vmatprep.subr.mxu0 0.0
    %104 = vmatpush1.xpose.msra.mxu0 0.0
    %105 = vmatprep.subr.mxu0 0.0
    %106 = vmatpush1.xpose.msra.mxu0 0.0
    %107 = vmatprep.subr.mxu0 0.0
    %108 = vmatpush1.xpose.msra.mxu0 0.0
    %109 = vmatprep.subr.mxu0 0.0
    %110 = vmatpush1.xpose.msra.mxu0 0.0
    %111 = vmatprep.subr.mxu0 0.0
    %112 = vmatpush1.xpose.msra.mxu0 0.0
    %113 = vmatprep.subr.mxu0 0.0
    %114 = vmatpush1.xpose.msra.mxu0 0.0
    %115 = vmatprep.subr.mxu0 0.0
    %116 = vmatpush1.xpose.msra.mxu0 0.0
    %117 = vmatprep.subr.mxu0 0.0
    %118 = vmatpush1.xpose.msra.mxu0 0.0
    %119 = vmatprep.subr.mxu0 0.0
    %120 = vmatpush1.xpose.msra.mxu0 0.0
    %121 = vmatprep.subr.mxu0 0.0
    %122 = vmatpush1.xpose.msra.mxu0 0.0
    %123 = vmatprep.subr.mxu0 0.0
    %124 = vmatpush1.xpose.msra.mxu0 0.0
    %125 = vmatprep.subr.mxu0 0.0
    %126 = vmatpush1.xpose.msra.mxu0 0.0
    %127 = vmatprep.subr.mxu0 0.0
    %128 = vmatpush1.xpose.msra.mxu0 0.0
    %129 = vmatprep.subr.mxu0 0.0
    %130 = vmatpush1.xpose.msra.mxu0 0.0
    %131 = vmatprep.subr.mxu0 0.0
    %132 = vmatpush1.xpose.msra.mxu0 0.0
    %133 = vmatprep.subr.mxu0 0.0
    %134 = vmatpush1.xpose.msra.mxu0 0.0
    %135 = vmatprep.subr.mxu0 0.0
    %136 = vmatpush1.xpose.msra.mxu0 0.0
    %137 = vmatprep.subr.mxu0 0.0
    %138 = vmatpush1.xpose.msra.mxu0 0.0
    %139 = vmatprep.subr.mxu0 0.0
    %140 = vmatpush1.xpose.msra.mxu0 0.0
    %141 = vmatprep.subr.mxu0 0.0
    %142 = vmatpush1.xpose.msra.mxu0 0.0
    %143 = vmatprep.subr.mxu0 0.0
    %144 = vmatpush1.xpose.msra.mxu0 0.0
    %145 = vmatprep.subr.mxu0 0.0
    %146 = vmatpush1.xpose.msra.mxu0 0.0
    %147 = vmatprep.subr.mxu0 0.0
    %148 = vmatpush1.xpose.msra.mxu0 0.0
    %149 = vmatprep.subr.mxu0 0.0
    %150 = vmatpush1.xpose.msra.mxu0 0.0
    %151 = vmatprep.mubr.f32.mxu0 0.0
    %v152 = vand.u32 %v77, 4294901760
    %v153 = vsub.f32 %v77, %v152
    %v154 = vand.u32 %v153, 4294901760
    %v155 = vsub.f32 %v153, %v154
    %v156 = vand.u32 %v155, 4294901760
    %157 = vmatmul.mubr.f32.gmra.mrb[0].mxu0 %v156
    %v158 = vpop.f32.mrb[0].mxu0
    %v159 = vadd.f32 0.0, %v158
    %v160 = vpop.f32.mrb[0].mxu0
    %161 = vdwg.mxu0
    %162 = vmatprep.subr.mxu0 0.0
    %v163 = vand.u32 %v80, 4294901760
    %v164 = vsub.f32 %v80, %v163
    %v165 = vand.u32 %v164, 4294901760
    %v166 = vsub.f32 %v164, %v165
    %v167 = vand.u32 %v166, 4294901760
    %168 = vmatpush1.xpose.msra.mxu0 %v167
    %169 = vmatprep.subr.mxu0 0.0
    %v170 = vand.u32 %v83, 4294901760
    %v171 = vsub.f32 %v83, %v170
    %v172 = vand.u32 %v171, 4294901760
    %v173 = vsub.f32 %v171, %v172
    %v174 = vand.u32 %v173, 4294901760
    %175 = vmatpush1.xpose.msra.mxu0 %v174
    %176 = vmatprep.subr.mxu0 0.0
    %177 = vmatpush1.xpose.msra.mxu0 0.0
    %178 = vmatprep.subr.mxu0 0.0
    %179 = vmatpush1.xpose.msra.mxu0 0.0
    %180 = vmatprep.subr.mxu0 0.0
    %181 = vmatpush1.xpose.msra.mxu0 0.0
    %182 = vmatprep.subr.mxu0 0.0
    %183 = vmatpush1.xpose.msra.mxu0 0.0
    %184 = vmatprep.subr.mxu0 0.0
    %185 = vmatpush1.xpose.msra.mxu0 0.0
    %186 = vmatprep.subr.mxu0 0.0
    %187 = vmatpush1.xpose.msra.mxu0 0.0
    %188 = vmatprep.subr.mxu0 0.0
    %189 = vmatpush1.xpose.msra.mxu0 0.0
    %190 = vmatprep.subr.mxu0 0.0
    %191 = vmatpush1.xpose.msra.mxu0 0.0
    %192 = vmatprep.subr.mxu0 0.0
    %193 = vmatpush1.xpose.msra.mxu0 0.0
    %194 = vmatprep.subr.mxu0 0.0
    %195 = vmatpush1.xpose.msra.mxu0 0.0
    %196 = vmatprep.subr.mxu0 0.0
    %197 = vmatpush1.xpose.msra.mxu0 0.0
    %198 = vmatprep.subr.mxu0 0.0
    %199 = vmatpush1.xpose.msra.mxu0 0.0
    %200 = vmatprep.subr.mxu0 0.0
    %201 = vmatpush1.xpose.msra.mxu0 0.0
    %202 = vmatprep.subr.mxu0 0.0
    %203 = vmatpush1.xpose.msra.mxu0 0.0
    %204 = vmatprep.subr.mxu0 0.0
    %205 = vmatpush1.xpose.msra.mxu0 0.0
    %206 = vmatprep.subr.mxu0 0.0
    %207 = vmatpush1.xpose.msra.mxu0 0.0
    %208 = vmatprep.subr.mxu0 0.0
    %209 = vmatpush1.xpose.msra.mxu0 0.0
    %210 = vmatprep.subr.mxu0 0.0
    %211 = vmatpush1.xpose.msra.mxu0 0.0
    %212 = vmatprep.subr.mxu0 0.0
    %213 = vmatpush1.xpose.msra.mxu0 0.0
    %214 = vmatprep.subr.mxu0 0.0
    %215 = vmatpush1.xpose.msra.mxu0 0.0
    %216 = vmatprep.subr.mxu0 0.0
    %217 = vmatpush1.xpose.msra.mxu0 0.0
    %218 = vmatprep.subr.mxu0 0.0
    %219 = vmatpush1.xpose.msra.mxu0 0.0
    %220 = vmatprep.subr.mxu0 0.0
    %221 = vmatpush1.xpose.msra.mxu0 0.0
    %222 = vmatprep.subr.mxu0 0.0
    %223 = vmatpush1.xpose.msra.mxu0 0.0
    %224 = vmatprep.subr.mxu0 0.0
    %225 = vmatpush1.xpose.msra.mxu0 0.0
    %226 = vmatprep.subr.mxu0 0.0
    %227 = vmatpush1.xpose.msra.mxu0 0.0
    %228 = vmatprep.subr.mxu0 0.0
    %229 = vmatpush1.xpose.msra.mxu0 0.0
    %230 = vmatprep.subr.mxu0 0.0
    %231 = vmatpush1.xpose.msra.mxu0 0.0
    %232 = vmatprep.subr.mxu0 0.0
    %233 = vmatpush1.xpose.msra.mxu0 0.0
    %234 = vmatprep.subr.mxu0 0.0
    %235 = vmatpush1.xpose.msra.mxu0 0.0
    %236 = vmatprep.mubr.f32.mxu0 0.0
    %v237 = vand.u32 %v77, 4294901760
    %238 = vmatmul.mubr.f32.gmra.mrb[0].mxu0 %v237
    %v239 = vpop.f32.mrb[0].mxu0
    %v240 = vadd.f32 %v159, %v239
    %v241 = vpop.f32.mrb[0].mxu0
    %242 = vdwg.mxu0
    %243 = vmatprep.subr.mxu0 0.0
    %v244 = vand.u32 %v80, 4294901760
    %v245 = vsub.f32 %v80, %v244
    %246 = vmatpush1.xpose.msra.mxu0 %v245
    %247 = vmatprep.subr.mxu0 0.0
    %v248 = vand.u32 %v83, 4294901760
    %v249 = vsub.f32 %v83, %v248
    %250 = vmatpush1.xpose.msra.mxu0 %v249
    %251 = vmatprep.subr.mxu0 0.0
    %252 = vmatpush1.xpose.msra.mxu0 0.0
    %253 = vmatprep.subr.mxu0 0.0
    %254 = vmatpush1.xpose.msra.mxu0 0.0
    %255 = vmatprep.subr.mxu0 0.0
    %256 = vmatpush1.xpose.msra.mxu0 0.0
    %257 = vmatprep.subr.mxu0 0.0
    %258 = vmatpush1.xpose.msra.mxu0 0.0
    %259 = vmatprep.subr.mxu0 0.0
    %260 = vmatpush1.xpose.msra.mxu0 0.0
    %261 = vmatprep.subr.mxu0 0.0
    %262 = vmatpush1.xpose.msra.mxu0 0.0
    %263 = vmatprep.subr.mxu0 0.0
    %264 = vmatpush1.xpose.msra.mxu0 0.0
    %265 = vmatprep.subr.mxu0 0.0
    %266 = vmatpush1.xpose.msra.mxu0 0.0
    %267 = vmatprep.subr.mxu0 0.0
    %268 = vmatpush1.xpose.msra.mxu0 0.0
    %269 = vmatprep.subr.mxu0 0.0
    %270 = vmatpush1.xpose.msra.mxu0 0.0
    %271 = vmatprep.subr.mxu0 0.0
    %272 = vmatpush1.xpose.msra.mxu0 0.0
    %273 = vmatprep.subr.mxu0 0.0
    %274 = vmatpush1.xpose.msra.mxu0 0.0
    %275 = vmatprep.subr.mxu0 0.0
    %276 = vmatpush1.xpose.msra.mxu0 0.0
    %277 = vmatprep.subr.mxu0 0.0
    %278 = vmatpush1.xpose.msra.mxu0 0.0
    %279 = vmatprep.subr.mxu0 0.0
    %280 = vmatpush1.xpose.msra.mxu0 0.0
    %281 = vmatprep.subr.mxu0 0.0
    %282 = vmatpush1.xpose.msra.mxu0 0.0
    %283 = vmatprep.subr.mxu0 0.0
    %284 = vmatpush1.xpose.msra.mxu0 0.0
    %285 = vmatprep.subr.mxu0 0.0
    %286 = vmatpush1.xpose.msra.mxu0 0.0
    %287 = vmatprep.subr.mxu0 0.0
    %288 = vmatpush1.xpose.msra.mxu0 0.0
    %289 = vmatprep.subr.mxu0 0.0
    %290 = vmatpush1.xpose.msra.mxu0 0.0
    %291 = vmatprep.subr.mxu0 0.0
    %292 = vmatpush1.xpose.msra.mxu0 0.0
    %293 = vmatprep.subr.mxu0 0.0
    %294 = vmatpush1.xpose.msra.mxu0 0.0
    %295 = vmatprep.subr.mxu0 0.0
    %296 = vmatpush1.xpose.msra.mxu0 0.0
    %297 = vmatprep.subr.mxu0 0.0
    %298 = vmatpush1.xpose.msra.mxu0 0.0
    %299 = vmatprep.subr.mxu0 0.0
    %300 = vmatpush1.xpose.msra.mxu0 0.0
    %301 = vmatprep.subr.mxu0 0.0
    %302 = vmatpush1.xpose.msra.mxu0 0.0
    %303 = vmatprep.subr.mxu0 0.0
    %304 = vmatpush1.xpose.msra.mxu0 0.0
    %305 = vmatprep.subr.mxu0 0.0
    %306 = vmatpush1.xpose.msra.mxu0 0.0
    %307 = vmatprep.subr.mxu0 0.0
    %308 = vmatpush1.xpose.msra.mxu0 0.0
    %309 = vmatprep.subr.mxu0 0.0
    %310 = vmatpush1.xpose.msra.mxu0 0.0
    %311 = vmatprep.mubr.f32.mxu0 0.0
    %v312 = vand.u32 %v77, 4294901760
    %v313 = vsub.f32 %v77, %v312
    %314 = vmatmul.mubr.f32.gmra.mrb[0].mxu0 %v313
    %v315 = vpop.f32.mrb[0].mxu0
    %v316 = vadd.f32 %v240, %v315
    %v317 = vpop.f32.mrb[0].mxu0
    %318 = vdwg.mxu0
    %319 = vmatprep.subr.mxu0 0.0
    %v320 = vand.u32 %v80, 4294901760
    %321 = vmatpush1.xpose.msra.mxu0 %v320
    %322 = vmatprep.subr.mxu0 0.0
    %v323 = vand.u32 %v83, 4294901760
    %324 = vmatpush1.xpose.msra.mxu0 %v323
    %325 = vmatprep.subr.mxu0 0.0
    %326 = vmatpush1.xpose.msra.mxu0 0.0
    %327 = vmatprep.subr.mxu0 0.0
    %328 = vmatpush1.xpose.msra.mxu0 0.0
    %329 = vmatprep.subr.mxu0 0.0
    %330 = vmatpush1.xpose.msra.mxu0 0.0
    %331 = vmatprep.subr.mxu0 0.0
    %332 = vmatpush1.xpose.msra.mxu0 0.0
    %333 = vmatprep.subr.mxu0 0.0
    %334 = vmatpush1.xpose.msra.mxu0 0.0
    %335 = vmatprep.subr.mxu0 0.0
    %336 = vmatpush1.xpose.msra.mxu0 0.0
    %337 = vmatprep.subr.mxu0 0.0
    %338 = vmatpush1.xpose.msra.mxu0 0.0
    %339 = vmatprep.subr.mxu0 0.0
    %340 = vmatpush1.xpose.msra.mxu0 0.0
    %341 = vmatprep.subr.mxu0 0.0
    %342 = vmatpush1.xpose.msra.mxu0 0.0
    %343 = vmatprep.subr.mxu0 0.0
    %344 = vmatpush1.xpose.msra.mxu0 0.0
    %345 = vmatprep.subr.mxu0 0.0
    %346 = vmatpush1.xpose.msra.mxu0 0.0
    %347 = vmatprep.subr.mxu0 0.0
    %348 = vmatpush1.xpose.msra.mxu0 0.0
    %349 = vmatprep.subr.mxu0 0.0
    %350 = vmatpush1.xpose.msra.mxu0 0.0
    %351 = vmatprep.subr.mxu0 0.0
    %352 = vmatpush1.xpose.msra.mxu0 0.0
    %353 = vmatprep.subr.mxu0 0.0
    %354 = vmatpush1.xpose.msra.mxu0 0.0
    %355 = vmatprep.subr.mxu0 0.0
    %356 = vmatpush1.xpose.msra.mxu0 0.0
    %357 = vmatprep.subr.mxu0 0.0
    %358 = vmatpush1.xpose.msra.mxu0 0.0
    %359 = vmatprep.subr.mxu0 0.0
    %360 = vmatpush1.xpose.msra.mxu0 0.0
    %361 = vmatprep.subr.mxu0 0.0
    %362 = vmatpush1.xpose.msra.mxu0 0.0
    %363 = vmatprep.subr.mxu0 0.0
    %364 = vmatpush1.xpose.msra.mxu0 0.0
    %365 = vmatprep.subr.mxu0 0.0
    %366 = vmatpush1.xpose.msra.mxu0 0.0
    %367 = vmatprep.subr.mxu0 0.0
    %368 = vmatpush1.xpose.msra.mxu0 0.0
    %369 = vmatprep.subr.mxu0 0.0
    %370 = vmatpush1.xpose.msra.mxu0 0.0
    %371 = vmatprep.subr.mxu0 0.0
    %372 = vmatpush1.xpose.msra.mxu0 0.0
    %373 = vmatprep.subr.mxu0 0.0
    %374 = vmatpush1.xpose.msra.mxu0 0.0
    %375 = vmatprep.subr.mxu0 0.0
    %376 = vmatpush1.xpose.msra.mxu0 0.0
    %377 = vmatprep.subr.mxu0 0.0
    %378 = vmatpush1.xpose.msra.mxu0 0.0
    %379 = vmatprep.subr.mxu0 0.0
    %380 = vmatpush1.xpose.msra.mxu0 0.0
    %381 = vmatprep.subr.mxu0 0.0
    %382 = vmatpush1.xpose.msra.mxu0 0.0
    %383 = vmatprep.subr.mxu0 0.0
    %384 = vmatpush1.xpose.msra.mxu0 0.0
    %385 = vmatprep.mubr.f32.mxu0 0.0
    %v386 = vand.u32 %v77, 4294901760
    %v387 = vsub.f32 %v77, %v386
    %v388 = vand.u32 %v387, 4294901760
    %389 = vmatmul.mubr.f32.gmra.mrb[0].mxu0 %v388
    %v390 = vpop.f32.mrb[0].mxu0
    %v391 = vadd.f32 %v316, %v390
    %v392 = vpop.f32.mrb[0].mxu0
    %393 = vdwg.mxu0
    %394 = vmatprep.subr.mxu0 0.0
    %v395 = vand.u32 %v80, 4294901760
    %v396 = vsub.f32 %v80, %v395
    %v397 = vand.u32 %v396, 4294901760
    %398 = vmatpush1.xpose.msra.mxu0 %v397
    %399 = vmatprep.subr.mxu0 0.0
    %v400 = vand.u32 %v83, 4294901760
    %v401 = vsub.f32 %v83, %v400
    %v402 = vand.u32 %v401, 4294901760
    %403 = vmatpush1.xpose.msra.mxu0 %v402
    %404 = vmatprep.subr.mxu0 0.0
    %405 = vmatpush1.xpose.msra.mxu0 0.0
    %406 = vmatprep.subr.mxu0 0.0
    %407 = vmatpush1.xpose.msra.mxu0 0.0
    %408 = vmatprep.subr.mxu0 0.0
    %409 = vmatpush1.xpose.msra.mxu0 0.0
    %410 = vmatprep.subr.mxu0 0.0
    %411 = vmatpush1.xpose.msra.mxu0 0.0
    %412 = vmatprep.subr.mxu0 0.0
    %413 = vmatpush1.xpose.msra.mxu0 0.0
    %414 = vmatprep.subr.mxu0 0.0
    %415 = vmatpush1.xpose.msra.mxu0 0.0
    %416 = vmatprep.subr.mxu0 0.0
    %417 = vmatpush1.xpose.msra.mxu0 0.0
    %418 = vmatprep.subr.mxu0 0.0
    %419 = vmatpush1.xpose.msra.mxu0 0.0
    %420 = vmatprep.subr.mxu0 0.0
    %421 = vmatpush1.xpose.msra.mxu0 0.0
    %422 = vmatprep.subr.mxu0 0.0
    %423 = vmatpush1.xpose.msra.mxu0 0.0
    %424 = vmatprep.subr.mxu0 0.0
    %425 = vmatpush1.xpose.msra.mxu0 0.0
    %426 = vmatprep.subr.mxu0 0.0
    %427 = vmatpush1.xpose.msra.mxu0 0.0
    %428 = vmatprep.subr.mxu0 0.0
    %429 = vmatpush1.xpose.msra.mxu0 0.0
    %430 = vmatprep.subr.mxu0 0.0
    %431 = vmatpush1.xpose.msra.mxu0 0.0
    %432 = vmatprep.subr.mxu0 0.0
    %433 = vmatpush1.xpose.msra.mxu0 0.0
    %434 = vmatprep.subr.mxu0 0.0
    %435 = vmatpush1.xpose.msra.mxu0 0.0
    %436 = vmatprep.subr.mxu0 0.0
    %437 = vmatpush1.xpose.msra.mxu0 0.0
    %438 = vmatprep.subr.mxu0 0.0
    %439 = vmatpush1.xpose.msra.mxu0 0.0
    %440 = vmatprep.subr.mxu0 0.0
    %441 = vmatpush1.xpose.msra.mxu0 0.0
    %442 = vmatprep.subr.mxu0 0.0
    %443 = vmatpush1.xpose.msra.mxu0 0.0
    %444 = vmatprep.subr.mxu0 0.0
    %445 = vmatpush1.xpose.msra.mxu0 0.0
    %446 = vmatprep.subr.mxu0 0.0
    %447 = vmatpush1.xpose.msra.mxu0 0.0
    %448 = vmatprep.subr.mxu0 0.0
    %449 = vmatpush1.xpose.msra.mxu0 0.0
    %450 = vmatprep.subr.mxu0 0.0
    %451 = vmatpush1.xpose.msra.mxu0 0.0
    %452 = vmatprep.subr.mxu0 0.0
    %453 = vmatpush1.xpose.msra.mxu0 0.0
    %454 = vmatprep.subr.mxu0 0.0
    %455 = vmatpush1.xpose.msra.mxu0 0.0
    %456 = vmatprep.subr.mxu0 0.0
    %457 = vmatpush1.xpose.msra.mxu0 0.0
    %458 = vmatprep.subr.mxu0 0.0
    %459 = vmatpush1.xpose.msra.mxu0 0.0
    %460 = vmatprep.subr.mxu0 0.0
    %461 = vmatpush1.xpose.msra.mxu0 0.0
    %462 = vmatprep.subr.mxu0 0.0
    %463 = vmatpush1.xpose.msra.mxu0 0.0
    %464 = vmatprep.mubr.f32.mxu0 0.0
    %v465 = vand.u32 %v77, 4294901760
    %466 = vmatmul.mubr.f32.gmra.mrb[0].mxu0 %v465
    %v467 = vpop.f32.mrb[0].mxu0
    %v468 = vadd.f32 %v391, %v467
    %v469 = vpop.f32.mrb[0].mxu0
    %470 = vdwg.mxu0
    %471 = vmatprep.subr.mxu0 0.0
    %v472 = vand.u32 %v80, 4294901760
    %473 = vmatpush1.xpose.msra.mxu0 %v472
    %474 = vmatprep.subr.mxu0 0.0
    %v475 = vand.u32 %v83, 4294901760
    %476 = vmatpush1.xpose.msra.mxu0 %v475
    %477 = vmatprep.subr.mxu0 0.0
    %478 = vmatpush1.xpose.msra.mxu0 0.0
    %479 = vmatprep.subr.mxu0 0.0
    %480 = vmatpush1.xpose.msra.mxu0 0.0
    %481 = vmatprep.subr.mxu0 0.0
    %482 = vmatpush1.xpose.msra.mxu0 0.0
    %483 = vmatprep.subr.mxu0 0.0
    %484 = vmatpush1.xpose.msra.mxu0 0.0
    %485 = vmatprep.subr.mxu0 0.0
    %486 = vmatpush1.xpose.msra.mxu0 0.0
    %487 = vmatprep.subr.mxu0 0.0
    %488 = vmatpush1.xpose.msra.mxu0 0.0
    %489 = vmatprep.subr.mxu0 0.0
    %490 = vmatpush1.xpose.msra.mxu0 0.0
    %491 = vmatprep.subr.mxu0 0.0
    %492 = vmatpush1.xpose.msra.mxu0 0.0
    %493 = vmatprep.subr.mxu0 0.0
    %494 = vmatpush1.xpose.msra.mxu0 0.0
    %495 = vmatprep.subr.mxu0 0.0
    %496 = vmatpush1.xpose.msra.mxu0 0.0
    %497 = vmatprep.subr.mxu0 0.0
    %498 = vmatpush1.xpose.msra.mxu0 0.0
    %499 = vmatprep.subr.mxu0 0.0
    %500 = vmatpush1.xpose.msra.mxu0 0.0
    %501 = vmatprep.subr.mxu0 0.0
    %502 = vmatpush1.xpose.msra.mxu0 0.0
    %503 = vmatprep.subr.mxu0 0.0
    %504 = vmatpush1.xpose.msra.mxu0 0.0
    %505 = vmatprep.subr.mxu0 0.0
    %506 = vmatpush1.xpose.msra.mxu0 0.0
    %507 = vmatprep.subr.mxu0 0.0
    %508 = vmatpush1.xpose.msra.mxu0 0.0
    %509 = vmatprep.subr.mxu0 0.0
    %510 = vmatpush1.xpose.msra.mxu0 0.0
    %511 = vmatprep.subr.mxu0 0.0
    %512 = vmatpush1.xpose.msra.mxu0 0.0
    %513 = vmatprep.subr.mxu0 0.0
    %514 = vmatpush1.xpose.msra.mxu0 0.0
    %515 = vmatprep.subr.mxu0 0.0
    %516 = vmatpush1.xpose.msra.mxu0 0.0
    %517 = vmatprep.subr.mxu0 0.0
    %518 = vmatpush1.xpose.msra.mxu0 0.0
    %519 = vmatprep.subr.mxu0 0.0
    %520 = vmatpush1.xpose.msra.mxu0 0.0
    %521 = vmatprep.subr.mxu0 0.0
    %522 = vmatpush1.xpose.msra.mxu0 0.0
    %523 = vmatprep.subr.mxu0 0.0
    %524 = vmatpush1.xpose.msra.mxu0 0.0
    %525 = vmatprep.subr.mxu0 0.0
    %526 = vmatpush1.xpose.msra.mxu0 0.0
    %527 = vmatprep.subr.mxu0 0.0
    %528 = vmatpush1.xpose.msra.mxu0 0.0
    %529 = vmatprep.subr.mxu0 0.0
    %530 = vmatpush1.xpose.msra.mxu0 0.0
    %531 = vmatprep.subr.mxu0 0.0
    %532 = vmatpush1.xpose.msra.mxu0 0.0
    %533 = vmatprep.subr.mxu0 0.0
    %534 = vmatpush1.xpose.msra.mxu0 0.0
    %535 = vmatprep.subr.mxu0 0.0
    %536 = vmatpush1.xpose.msra.mxu0 0.0
    %537 = vmatprep.mubr.f32.mxu0 0.0
    %v538 = vand.u32 %v77, 4294901760
    %539 = vmatmul.mubr.f32.gmra.mrb[0].mxu0 %v538
    %v540 = vpop.f32.mrb[0].mxu0
    %v541 = vadd.f32 %v468, %v540
    %v542 = vpop.f32.mrb[0].mxu0
    %543 = vdwg.mxu0
    %vm544 = vcmask 130048
    %545 = vst.msk [vmem:[#allocation8] sm:$0xff] %vm544, %v541
    // Predicated region
    $region26: #{tpu_custom_call.1} parent=1 // pred_check
      _
    $region27: #{tpu_custom_call.1} parent=1 // pred_check_branch
      %547 = sbr.rel (0) target = $region29
    $region28: #{tpu_custom_call.1} parent=1 // pred_region
      %s549 = ssub.s32 128, 128
      %550 = vsyncadd [#allocation4], %s549
      %s552 = sshll.u32 [#allocation8], 4
      %s553 = int_to_ptr.vmem [resolvable:$true] %s552
      %555 = dma.vmem_to_hbm [thread:$0]  %s553, 128, %s3, [#allocation4]
    $region29: #{tpu_custom_call.1} parent=1 // pred_fallthru
      _
    // Predicated region
    $region30: #{tpu_custom_call.1} parent=1 // pred_check
      _
    $region31: #{tpu_custom_call.1} parent=1 // pred_check_branch
      %557 = sbr.rel (0) target = $region33
    $region32: #{tpu_custom_call.1} parent=1 // pred_region
      %558 = dma.done [#allocation4], 128
    $region33: #{tpu_custom_call.1} parent=1 // pred_fallthru
      _
    %559 = vsyncpa [#allocation3], 1
    %560 = vsyncpa [#allocation6], 1
    %561 = vsyncpa [#allocation4], 1

</llo_original>
